<compile_context>
chip_gen: v7x
topology: tpu7x:2x2x1
jax: 0.10.0
libtpu: 0.0.40
codegen_flags: <defaults>
</compile_context>

<pallas_src>
import jax
import jax.numpy as jnp
from jax.experimental import pallas as pl
from jax.experimental.pallas import tpu as pltpu

LANE = 128
CHUNK = 128  # rows per unrolled sub-step: 16 f32 vregs per operand, no spill risk


def _default_row_tile(itemsize: int) -> int:
    """Generation-aware default row-tile cap (rows of 128 lanes)."""
    kind = ""
    try:
        kind = jax.devices()[0].device_kind.lower()
    except Exception:
        pass
    if "v7" in kind or "7x" in kind:
        base = 4096   # ~3.2 TB/s HBM: larger tiles amortize per-step overhead
    elif "v6" in kind:
        base = 2048
    else:
        base = 1024   # v5e: 16 MiB scoped VMEM default; 1024 is near roofline
    if itemsize <= 2:
        base *= 2     # 16-bit inputs: same bytes per block
    return base


def _pick_row_tile(rows: int, cap: int) -> int:
    """Largest legal row tile <= cap; tail handled by cdiv grid + masking."""
    cap = max(8, int(cap))
    if rows <= cap:
        return rows            # block equal to the full dim is always legal
    return (cap // 8) * 8      # sublane-aligned; never a full-extent fallback


def _make_l1_kernel(tm: int, rows: int):
    """Kernel over one (tm, 128) tile of pred and of target frame 0.

    Emits one (8, 128) f32 partial sum per grid point (no carried accumulator,
    so both grid axes are independent/parallel).
    """
    needs_mask = (rows % tm) != 0
    assert tm % 8 == 0, tm

    def l1_kernel(pred_ref, tgt_ref, out_ref):
        j = pl.program_id(1)
        # Rows of this tile that are in-bounds (>= tm on interior tiles).
        valid = rows - j * tm

        acc = jnp.zeros((8, LANE), jnp.float32)
        c0 = 0
        while c0 < tm:                      # static, fully unrolled sub-loop
            csz = min(CHUNK, tm - c0)       # always a multiple of 8
            p = pred_ref[pl.ds(c0, csz), :].astype(jnp.float32)
            t = tgt_ref[pl.ds(c0, csz), :].astype(jnp.float32)
            d = jnp.abs(p - t)
            if needs_mask:
                row_ids = jax.lax.broadcasted_iota(jnp.int32, (csz, LANE), 0) + c0
                d = jnp.where(row_ids < valid, d, 0.0)
            # Fold (csz, 128) into (8, 128) with pure elementwise VALU adds.
            acc = acc + d.reshape(csz // 8, 8, LANE).sum(axis=0)
            c0 += csz

        out_ref[...] = acc

    return l1_kernel


def l1_rgb_loss(pred, target, weight: float, *, row_tile: int | None = None):
    """weight * mean(|pred - target[:, 0]|), reduction done in a Pallas kernel.

    pred:   (B, C, H, W)
    target: (B, T, C, H, W)   (only frame 0 is read, via the BlockSpec)
    """
    B = pred.shape[0]
    T = target.shape[1]
    assert target.shape[0] == B and target.shape[2:] == pred.shape[1:], (
        target.shape, pred.shape)

    per_sample = 1
    for d in pred.shape[1:]:
        per_sample *= int(d)

    itemsize = min(jnp.dtype(pred.dtype).itemsize, jnp.dtype(target.dtype).itemsize)
    sub_block = 8 * LANE  # 1024 elements -> rows always a multiple of 8

    if per_sample % sub_block == 0:
        # Zero-copy path: frame 0 selected directly from the video by the
        # target index_map; no wrapper slice copy.
        rows = per_sample // LANE
        pred3 = pred.reshape(B, rows, LANE)
        tgt4 = target.reshape(B, T, rows, LANE)
    else:
        # Rare unaligned path: slice frame 0 (one-frame copy) and zero-pad both
        # operands to a multiple of 1024; |0 - 0| = 0 contributes nothing.
        pad = (-per_sample) % sub_block
        rows = (per_sample + pad) // LANE
        pred3 = jnp.pad(pred.reshape(B, per_sample), ((0, 0), (0, pad)))
        pred3 = pred3.reshape(B, rows, LANE)
        frame0 = jnp.pad(target[:, 0].reshape(B, per_sample), ((0, 0), (0, pad)))
        tgt4 = frame0.reshape(B, 1, rows, LANE)

    cap = int(row_tile) if row_tile is not None else _default_row_tile(int(itemsize))
    tm = _pick_row_tile(rows, cap)
    n_j = pl.cdiv(rows, tm)

    partials = pl.pallas_call(
        _make_l1_kernel(tm, rows),
        out_shape=jax.ShapeDtypeStruct((B, n_j, 8, LANE), jnp.float32),
        grid_spec=pltpu.PrefetchScalarGridSpec(
            num_scalar_prefetch=0,
            grid=(B, n_j),
            in_specs=[
                # pred: (B, rows, 128) -> (tm, 128) block for (b, j)
                pl.BlockSpec((None, tm, LANE), lambda b, j: (b, j, 0)),
                # target: (B, T, rows, 128) -> frame 0 selected in the index_map
                pl.BlockSpec((None, None, tm, LANE), lambda b, j: (b, 0, j, 0)),
            ],
            # One lane-dense (8, 128) partial-sum block per (batch, row-tile).
            out_specs=pl.BlockSpec((None, None, 8, LANE), lambda b, j: (b, j, 0, 0)),
        ),
        compiler_params=pltpu.CompilerParams(
            # No carried accumulator -> both axes independent; v7x can shard
            # either axis across its two TensorCores even when B == 1.
            dimension_semantics=("parallel", "parallel"),
        ),
    )(pred3, tgt4)

    scale = jnp.float32(float(weight) / float(B * per_sample))
    return scale * jnp.sum(partials)


if __name__ == "__main__":
    key = jax.random.PRNGKey(0)
    weight = 0.5  # L1RGB(weight=0.5)
    ks = jax.random.split(key, 6)

    # Test 1: B=2, T=3, C=4, H=16, W=16 (rows = 8, single tile, zero-copy path).
    B, T, C, H, W = 2, 3, 4, 16, 16
    target1 = jax.random.normal(ks[0], (B, T, C, H, W), dtype=jnp.float32)
    pred1 = jax.random.normal(ks[1], (B, C, H, W), dtype=jnp.float32)
    loss1 = jax.block_until_ready(l1_rgb_loss(pred1, target1, weight))
    ref1 = weight * jnp.mean(jnp.abs(pred1 - target1[:, 0]))
    assert jnp.allclose(loss1, ref1, rtol=1e-5, atol=1e-6), (loss1, ref1)

    # Test 2: multi-row-step grid + masked partial last tile
    # (rows = 32, row_tile=24 -> 2 row steps, last step has 8 valid rows).
    B2, T2, C2, H2, W2 = 2, 2, 4, 32, 32
    target2 = jax.random.normal(ks[2], (B2, T2, C2, H2, W2), dtype=jnp.float32)
    pred2 = jax.random.normal(ks[3], (B2, C2, H2, W2), dtype=jnp.float32)
    loss2 = jax.block_until_ready(l1_rgb_loss(pred2, target2, weight, row_tile=24))
    ref2 = weight * jnp.mean(jnp.abs(pred2 - target2[:, 0]))
    assert jnp.allclose(loss2, ref2, rtol=1e-5, atol=1e-6), (loss2, ref2)

    # Test 3: C*H*W = 300 (not a multiple of 1024) -> wrapper zero-pad path.
    B3, T3, C3, H3, W3 = 2, 2, 3, 10, 10
    target3 = jax.random.normal(ks[4], (B3, T3, C3, H3, W3), dtype=jnp.float32)
    pred3 = jax.random.normal(ks[5], (B3, C3, H3, W3), dtype=jnp.float32)
    loss3 = jax.block_until_ready(l1_rgb_loss(pred3, target3, weight))
    ref3 = weight * jnp.mean(jnp.abs(pred3 - target3[:, 0]))
    assert jnp.allclose(loss3, ref3, rtol=1e-5, atol=1e-6), (loss3, ref3)

    print("KERNEL_OK")
</pallas_src>

<mosaic_0001>
module attributes {stable_mosaic.version = 11 : i64} {
  func.func @l1_kernel(%arg0: i32, %arg1: i32, %arg2: memref<1x8x128xf32, #tpu.memory_space<vmem>>, %arg3: memref<1x1x8x128xf32, #tpu.memory_space<vmem>>, %arg4: memref<1x1x8x128xf32, #tpu.memory_space<vmem>>) attributes {dimension_semantics = [#tpu.dimension_semantics<parallel>, #tpu.dimension_semantics<parallel>], iteration_bounds = array<i64: 2, 1>, scalar_prefetch = 0 : i64, scratch_operands = 0 : i64, tpu.core_type = #tpu.core_type<tc>, window_params = [{transform_indices = @transform_0, window_bounds = array<i64: 1, 8, 128>}, {transform_indices = @transform_1, window_bounds = array<i64: 1, 1, 8, 128>}, {transform_indices = @transform_2, window_bounds = array<i64: 1, 1, 8, 128>}]} {
    %cst = arith.constant 0.000000e+00 : f32
    %0 = vector.broadcast %cst : f32 to vector<8x128xf32>
    %c0 = arith.constant 0 : index
    %c0_0 = arith.constant 0 : index
    %c0_1 = arith.constant 0 : index
    %1 = vector.load %arg2[%c0, %c0_0, %c0_1] : memref<1x8x128xf32, #tpu.memory_space<vmem>>, vector<1x8x128xf32>
    %2 = vector.shape_cast %1 : vector<1x8x128xf32> to vector<8x128xf32>
    %c0_2 = arith.constant 0 : index
    %c0_3 = arith.constant 0 : index
    %c0_4 = arith.constant 0 : index
    %c0_5 = arith.constant 0 : index
    %3 = vector.load %arg3[%c0_2, %c0_3, %c0_4, %c0_5] : memref<1x1x8x128xf32, #tpu.memory_space<vmem>>, vector<1x1x8x128xf32>
    %4 = vector.shape_cast %3 : vector<1x1x8x128xf32> to vector<8x128xf32>
    %5 = arith.subf %2, %4 : vector<8x128xf32>
    %6 = math.absf %5 : vector<8x128xf32>
    %7 = vector.shape_cast %6 : vector<8x128xf32> to vector<1x8x128xf32>
    %cst_6 = arith.constant dense<0.000000e+00> : vector<8x128xf32>
    %8 = vector.multi_reduction <add>, %7, %cst_6 [0] : vector<1x8x128xf32> to vector<8x128xf32>
    %9 = arith.addf %0, %8 : vector<8x128xf32>
    %c0_7 = arith.constant 0 : index
    %c0_8 = arith.constant 0 : index
    %c0_9 = arith.constant 0 : index
    %c0_10 = arith.constant 0 : index
    %10 = vector.load %arg4[%c0_7, %c0_8, %c0_9, %c0_10] : memref<1x1x8x128xf32, #tpu.memory_space<vmem>>, vector<1x1x8x128xf32>
    %11 = vector.shape_cast %10 : vector<1x1x8x128xf32> to vector<8x128xf32>
    %12 = vector.shape_cast %9 : vector<8x128xf32> to vector<1x1x8x128xf32>
    tpu.vector_store %arg4[%c0_7, %c0_8, %c0_9, %c0_10], %12 {strides = array<i32>} : memref<1x1x8x128xf32, #tpu.memory_space<vmem>>, vector<1x1x8x128xf32>,
    return
  }
  func.func @transform_0(%arg0: i32, %arg1: i32) -> (i32, i32, i32) {
    %c0_i32 = arith.constant 0 : i32
    %c0_i32_0 = arith.constant 0 : i32
    return %arg0, %arg1, %c0_i32 : i32, i32, i32
  }
  func.func @transform_1(%arg0: i32, %arg1: i32) -> (i32, i32, i32, i32) {
    %c0_i32 = arith.constant 0 : i32
    %c0_i32_0 = arith.constant 0 : i32
    %c0_i32_1 = arith.constant 0 : i32
    return %arg0, %c0_i32, %arg1, %c0_i32_0 : i32, i32, i32, i32
  }
  func.func @transform_2(%arg0: i32, %arg1: i32) -> (i32, i32, i32, i32) {
    %c0_i32 = arith.constant 0 : i32
    %c0_i32_0 = arith.constant 0 : i32
    %c0_i32_1 = arith.constant 0 : i32
    return %arg0, %arg1, %c0_i32, %c0_i32_0 : i32, i32, i32, i32
  }
}

</mosaic_0001>

<llo_original>
// kernel: tpu_custom_call.1
$region0: #{tpu_custom_call.1}
  #allocation0 [shape = 'u32[]', space=smem, size = 0x4, offset = 0x4, fixed_abs, tag = 'smem constant byte address 0x4 - core index']
  #allocation1 [shape = 'u32[144,128]{1,0:T(1,128)}', space=vmem, size = 0x12000, scoped, tag = 'internal scratch']
  %s0 = inlined_call_operand.hbm [shape: f32[2,8,128], index: 0, kind: input, shape index: {}]
  %s1 = inlined_call_operand.hbm [shape: f32[2,3,8,128], index: 1, kind: input, shape index: {}]
  %s2 = inlined_call_operand.hbm [shape: f32[2,1,8,128], index: 2, kind: output, shape index: {}]
  %s3 = sld [smem:[#allocation0]]
  $region49: #{tpu_custom_call.1} parent=0
    _
  %s5 = ssub.s32 1, %s3
  %s6 = scalar_select 0, %s5, %s3
  $region1: #{tpu_custom_call.1} parent=0
    #allocation2 [shape = 'u8[8192]{0}', space=vmem, size = 0x2000, scoped, tag = 'input window, operand 0']
    #allocation3 [shape = 's32[2]{0}', space=sflag, size = 0x8, scoped, tag = 'scoped memory for tpu_custom_call.1']
    #allocation4 [shape = 's32[2]{0}', space=sflag, size = 0x8, scoped, tag = 'scoped memory for tpu_custom_call.1']
    #allocation5 [shape = 'u8[8192]{0}', space=vmem, size = 0x2000, scoped, tag = 'input window, operand 1']
    #allocation6 [shape = 's32[2]{0}', space=sflag, size = 0x8, scoped, tag = 'scoped memory for tpu_custom_call.1']
    #allocation7 [shape = 'u8[8192]{0}', space=vmem, size = 0x2000, scoped, tag = 'output window, operand 0']
    %7 = vsyncpa [#allocation3], 0
    %s8 = scalar_lea.sflag [#allocation3], 1
    %9 = vsyncpa %s8, 0
    %10 = vsyncpa [#allocation6], 0
    %s11 = scalar_lea.sflag [#allocation6], 1
    %12 = vsyncpa %s11, 0
    %13 = vsyncpa [#allocation4], 0
    %s14 = scalar_lea.sflag [#allocation4], 1
    %15 = vsyncpa %s14, 0
    loop: start=0, step=1, limit=4
    $region2: #{tpu_custom_call.1} parent=1 // loop_pre_header
      _
    $region3: #{tpu_custom_call.1} parent=1 // loop_header
      %s17 = sphi 0, %s21
      %p18 = scmp.ge.s32.totalorder %s17, 4
      %s24 = sphi 0, %s36
      %s25 = sphi 0, %s32
      %s26 = sphi 0, %s24
      %s27 = sphi 0, %s25
      %s28 = sphi 0, %s26
      %s29 = sphi 0, %s27
      %s41 = sphi 0, %s43
      %s44 = sphi 0, %s41
      %s45 = sphi 0, %s44
      %s61 = sphi 0, %s45
      %s69 = sphi 0, %s71
      %s72 = sphi 0, %s69
      %s73 = sphi 0, %s72
      %s89 = sphi 0, %s73
      %s97 = sphi 0, %s99
      %s100 = sphi 0, %s97
      %s101 = sphi 0, %s100
      %s117 = sphi 0, %s101
    $region4: #{tpu_custom_call.1} parent=1 // loop_header_branch
      %20 = sbr.rel (%p18) target = $region8
    $region5: #{tpu_custom_call.1} parent=1 // loop_body
      %s22 = ssub.s32 %s17, 1
      %s23 = ssub.s32 %s17, 2
      %s30 = sadd.s32 1, %s25
      %p31 = scmp.ge.s32.totalorder %s30, 1
      %s32 = scalar_select %p31, 0, %s30
      %s33 = sadd.s32 1, %s24
      %s34 = scalar_select %p31, %s33, %s24
      %p35 = scmp.ge.s32.totalorder %s34, 2
      %s36 = scalar_select %p35, 0, %s34
      %s37 = ssub.s32 %s24, %s36
      %s38 = ssub.s32 %s25, %s32
      %s39 = sor.u32 %s37, %s38
      %p40 = scmp.eq.s32.totalorder %s39, 0
      %s42 = sadd.s32 %s41, 1
      %s43 = scalar_select %p40, %s41, %s42
      %p46 = pneg %p40
      %p47 = scmp.eq.s32.totalorder %s17, 1
      %p48 = por %p46, %p47
      %p49 = scmp.ne.s32.totalorder %s41, %s44
      %p50 = scmp.eq.s32.totalorder %s17, 0
      %p51 = por %p49, %p50
      %p52 = scmp.ne.s32.totalorder %s41, %s44
      %p53 = scmp.eq.s32.totalorder %s22, 1
      %p54 = por %p52, %p53
      %p55 = scmp.ne.s32.totalorder %s44, %s45
      %p56 = scmp.eq.s32.totalorder %s22, 0
      %p57 = por %p55, %p56
      %p58 = scmp.ne.s32.totalorder %s44, %s45
      %p59 = scmp.eq.s32.totalorder %s23, 1
      %p60 = por %p58, %p59
      %p62 = scmp.ne.s32.totalorder %s45, %s61
      %p63 = scmp.eq.s32.totalorder %s23, 0
      %p64 = por %p62, %p63
      %s65 = ssub.s32 %s24, %s36
      %s66 = ssub.s32 %s25, %s32
      %s67 = sor.u32 %s65, %s66
      %p68 = scmp.eq.s32.totalorder %s67, 0
      %s70 = sadd.s32 %s69, 1
      %s71 = scalar_select %p68, %s69, %s70
      %p74 = pneg %p68
      %p75 = scmp.eq.s32.totalorder %s17, 1
      %p76 = por %p74, %p75
      %p77 = scmp.ne.s32.totalorder %s69, %s72
      %p78 = scmp.eq.s32.totalorder %s17, 0
      %p79 = por %p77, %p78
      %p80 = scmp.ne.s32.totalorder %s69, %s72
      %p81 = scmp.eq.s32.totalorder %s22, 1
      %p82 = por %p80, %p81
      %p83 = scmp.ne.s32.totalorder %s72, %s73
      %p84 = scmp.eq.s32.totalorder %s22, 0
      %p85 = por %p83, %p84
      %p86 = scmp.ne.s32.totalorder %s72, %s73
      %p87 = scmp.eq.s32.totalorder %s23, 1
      %p88 = por %p86, %p87
      %p90 = scmp.ne.s32.totalorder %s73, %s89
      %p91 = scmp.eq.s32.totalorder %s23, 0
      %p92 = por %p90, %p91
      %s93 = ssub.s32 %s24, %s36
      %s94 = ssub.s32 %s25, %s32
      %s95 = sor.u32 %s93, %s94
      %p96 = scmp.eq.s32.totalorder %s95, 0
      %s98 = sadd.s32 %s97, 1
      %s99 = scalar_select %p96, %s97, %s98
      %p102 = pneg %p96
      %p103 = scmp.eq.s32.totalorder %s17, 1
      %p104 = por %p102, %p103
      %p105 = scmp.ne.s32.totalorder %s97, %s100
      %p106 = scmp.eq.s32.totalorder %s17, 0
      %p107 = por %p105, %p106
      %p108 = scmp.ne.s32.totalorder %s97, %s100
      %p109 = scmp.eq.s32.totalorder %s22, 1
      %p110 = por %p108, %p109
      %p111 = scmp.ne.s32.totalorder %s100, %s101
      %p112 = scmp.eq.s32.totalorder %s22, 0
      %p113 = por %p111, %p112
      %p114 = scmp.ne.s32.totalorder %s100, %s101
      %p115 = scmp.eq.s32.totalorder %s23, 1
      %p116 = por %p114, %p115
      %p118 = scmp.ne.s32.totalorder %s101, %s117
      %p119 = scmp.eq.s32.totalorder %s23, 0
      %p120 = por %p118, %p119
      %p121 = scmp.le.s32.totalorder 1, %s17
      %p122 = scmp.lt.s32.totalorder %s17, 3
      %p123 = pnand %p121, %p122
      %p124 = pneg %p123
      // Predicated region
      $region9: #{tpu_custom_call.1} parent=5 // pred_check
        _
      $region10: #{tpu_custom_call.1} parent=5 // pred_check_branch
        %126 = sbr.rel (%p123) target = $region12
      $region11: #{tpu_custom_call.1} parent=5 // pred_region
        %s127 = ssub.s32 %s17, 1
      $region12: #{tpu_custom_call.1} parent=5 // pred_fallthru
        _
      %p128 = scmp.lt.s32.totalorder %s17, 2
      // Predicated region
      $region13: #{tpu_custom_call.1} parent=5 // pred_check
        %p129 = pneg %p128
      $region14: #{tpu_custom_call.1} parent=5 // pred_check_branch
        %131 = sbr.rel (%p129) target = $region16
      $region15: #{tpu_custom_call.1} parent=5 // pred_region
        // Predicated region
        $region17: #{tpu_custom_call.1} parent=15 // pred_check
          %p132 = pneg %p51
        $region18: #{tpu_custom_call.1} parent=15 // pred_check_branch
          %134 = sbr.rel (%p132) target = $region20
        $region19: #{tpu_custom_call.1} parent=15 // pred_region
          %s135 = sand.u32 %s41, 1
          %s136 = scalar_lea.sflag [#allocation3], %s135
          %s137 = sand.u32 %s41, 1
          %s138 = smul.addr %s137, 8
          %s139 = scalar_lea.vmem [#allocation2], %s138
          %s141 = ssub.s32 128, 128
          %142 = vsyncadd %s136, %s141
          %s143 = sadd.s32 %s25, %s24
          %s144 = smul.addr %s143, 128
          %s145 = scalar_lea.hbm %s0, %s144
          %s147 = sshll.u32 %s139, 4
          %s148 = int_to_ptr.vmem [resolvable:$true] %s147
          %150 = dma.hbm_to_vmem [thread:$0]  %s145, 128, %s148, %s136
        $region20: #{tpu_custom_call.1} parent=15 // pred_fallthru
          _
        // Predicated region
        $region21: #{tpu_custom_call.1} parent=15 // pred_check
          %p151 = pneg %p79
        $region22: #{tpu_custom_call.1} parent=15 // pred_check_branch
          %153 = sbr.rel (%p151) target = $region24
        $region23: #{tpu_custom_call.1} parent=15 // pred_region
          %s154 = sand.u32 %s69, 1
          %s155 = scalar_lea.sflag [#allocation6], %s154
          %s156 = sand.u32 %s69, 1
          %s157 = smul.addr %s156, 8
          %s158 = scalar_lea.vmem [#allocation5], %s157
          %s160 = ssub.s32 128, 128
          %161 = vsyncadd %s155, %s160
          %s162 = smul.addr %s24, 3
          %s163 = sadd.s32 %s25, %s162
          %s164 = smul.addr %s163, 128
          %s165 = scalar_lea.hbm %s1, %s164
          %s167 = sshll.u32 %s158, 4
          %s168 = int_to_ptr.vmem [resolvable:$true] %s167
          %170 = dma.hbm_to_vmem [thread:$0]  %s165, 128, %s168, %s155
        $region24: #{tpu_custom_call.1} parent=15 // pred_fallthru
          _
      $region16: #{tpu_custom_call.1} parent=5 // pred_fallthru
        _
      %p171 = scmp.le.s32.totalorder 1, %s17
      %p172 = scmp.lt.s32.totalorder %s17, 3
      %p173 = pnand %p171, %p172
      %p174 = pneg %p173
      // Predicated region
      $region25: #{tpu_custom_call.1} parent=5 // pred_check
        _
      $region26: #{tpu_custom_call.1} parent=5 // pred_check_branch
        %176 = sbr.rel (%p173) target = $region28
      $region27: #{tpu_custom_call.1} parent=5 // pred_region
        %s177 = ssub.s32 %s17, 1
        %s178 = sand.u32 %s44, 1
        %s179 = scalar_lea.sflag [#allocation3], %s178
        %s180 = sand.u32 %s44, 1
        %s181 = smul.addr %s180, 8
        %s182 = scalar_lea.vmem [#allocation2], %s181
        // Predicated region
        $region29: #{tpu_custom_call.1} parent=27 // pred_check
          %p183 = pneg %p57
        $region30: #{tpu_custom_call.1} parent=27 // pred_check_branch
          %185 = sbr.rel (%p183) target = $region32
        $region31: #{tpu_custom_call.1} parent=27 // pred_region
          %186 = dma.done %s179, 128
        $region32: #{tpu_custom_call.1} parent=27 // pred_fallthru
          _
        %s187 = sand.u32 %s72, 1
        %s188 = scalar_lea.sflag [#allocation6], %s187
        %s189 = sand.u32 %s72, 1
        %s190 = smul.addr %s189, 8
        %s191 = scalar_lea.vmem [#allocation5], %s190
        // Predicated region
        $region33: #{tpu_custom_call.1} parent=27 // pred_check
          %p192 = pneg %p85
        $region34: #{tpu_custom_call.1} parent=27 // pred_check_branch
          %194 = sbr.rel (%p192) target = $region36
        $region35: #{tpu_custom_call.1} parent=27 // pred_region
          %195 = dma.done %s188, 128
        $region36: #{tpu_custom_call.1} parent=27 // pred_fallthru
          _
        %s196 = sand.u32 %s44, 1
        %s197 = scalar_lea.sflag [#allocation3], %s196
        %s198 = sand.u32 %s44, 1
        %s199 = smul.addr %s198, 8
        %s200 = scalar_lea.vmem [#allocation2], %s199
        %p201 = pneg %p57
        %p202 = pneg %p54
        %s203 = sand.u32 %s72, 1
        %s204 = scalar_lea.sflag [#allocation6], %s203
        %s205 = sand.u32 %s72, 1
        %s206 = smul.addr %s205, 8
        %s207 = scalar_lea.vmem [#allocation5], %s206
        %p208 = pneg %p85
        %p209 = pneg %p82
        %p210 = pneg %p113
        %p211 = pneg %p110
        %s212 = sand.u32 %s100, 1
        %s213 = scalar_lea.sflag [#allocation4], %s212
        %s214 = sand.u32 %s100, 1
        %s215 = smul.addr %s214, 8
        %s216 = scalar_lea.vmem [#allocation7], %s215
        %v217 = vld [vmem:[%s182] sm:$0xff]
        %v218 = vld [vmem:[%s191] sm:$0xff]
        %v219 = vsub.f32 %v217, %v218
        %v220 = vand.u32 2147483647, %v219
        %v221 = vadd.f32 %v220, 0.0
        %v222 = vadd.f32 %v221, 0.0
        %223 = vst [vmem:[%s216] sm:$0xff] %v222
        %s224 = sand.u32 %s100, 1
        %s225 = scalar_lea.sflag [#allocation4], %s224
        %s226 = sand.u32 %s100, 1
        %s227 = smul.addr %s226, 8
        %s228 = scalar_lea.vmem [#allocation7], %s227
        // Predicated region
        $region37: #{tpu_custom_call.1} parent=27 // pred_check
          %p229 = pneg %p110
        $region38: #{tpu_custom_call.1} parent=27 // pred_check_branch
          %231 = sbr.rel (%p229) target = $region40
        $region39: #{tpu_custom_call.1} parent=27 // pred_region
          %s233 = ssub.s32 128, 128
          %234 = vsyncadd %s225, %s233
          %s235 = sadd.s32 %s27, %s26
          %s236 = smul.addr %s235, 128
          %s237 = scalar_lea.hbm %s2, %s236
          %s239 = sshll.u32 %s228, 4
          %s240 = int_to_ptr.vmem [resolvable:$true] %s239
          %242 = dma.vmem_to_hbm [thread:$0]  %s240, 128, %s237, %s225
        $region40: #{tpu_custom_call.1} parent=27 // pred_fallthru
          _
      $region28: #{tpu_custom_call.1} parent=5 // pred_fallthru
        _
      %p243 = scmp.le.s32.totalorder 2, %s17
      // Predicated region
      $region41: #{tpu_custom_call.1} parent=5 // pred_check
        %p244 = pneg %p243
      $region42: #{tpu_custom_call.1} parent=5 // pred_check_branch
        %246 = sbr.rel (%p244) target = $region44
      $region43: #{tpu_custom_call.1} parent=5 // pred_region
        %s247 = ssub.s32 %s17, 2
        // Predicated region
        $region45: #{tpu_custom_call.1} parent=43 // pred_check
          %p248 = pneg %p116
        $region46: #{tpu_custom_call.1} parent=43 // pred_check_branch
          %250 = sbr.rel (%p248) target = $region48
        $region47: #{tpu_custom_call.1} parent=43 // pred_region
          %s251 = sand.u32 %s101, 1
          %s252 = scalar_lea.sflag [#allocation4], %s251
          %s253 = sand.u32 %s101, 1
          %s254 = smul.addr %s253, 8
          %s255 = scalar_lea.vmem [#allocation7], %s254
          %256 = dma.done %s252, 128
        $region48: #{tpu_custom_call.1} parent=43 // pred_fallthru
          _
      $region44: #{tpu_custom_call.1} parent=5 // pred_fallthru
        _
    $region6: #{tpu_custom_call.1} parent=1 // loop_footer
      %s21 = sadd.s32 1, %s17
    $region7: #{tpu_custom_call.1} parent=1 // loop_footer_branch
      %16 = sbr.rel target = $region3
    $region8: #{tpu_custom_call.1} parent=1 // loop_exit
      _
    %257 = vsyncpa [#allocation3], 1
    %s258 = scalar_lea.sflag [#allocation3], 1
    %259 = vsyncpa %s258, 1
    %260 = vsyncpa [#allocation6], 1
    %s261 = scalar_lea.sflag [#allocation6], 1
    %262 = vsyncpa %s261, 1
    %263 = vsyncpa [#allocation4], 1
    %s264 = scalar_lea.sflag [#allocation4], 1
    %265 = vsyncpa %s264, 1

</llo_original>
